<compile_context>
chip_gen: v7x
topology: tpu7x:2x2x1
jax: 0.10.0
libtpu: 0.0.40
codegen_flags: <defaults>
</compile_context>

<pallas_src>
import functools
import math

import jax
import jax.numpy as jnp
from jax.experimental import pallas as pl
from jax.experimental.pallas import tpu as pltpu


def _avgpool1d_kernel(x_ref, o_ref, *, K, P, L, L_out):
    # x_ref: (row_tile, Lpad) rows, zero-padded with P leading zeros (and
    # trailing zeros up to a lane-aligned width). Window for output col i
    # covers padded cols i .. i+K-1.
    x = x_ref[...].astype(jnp.float32)
    rt = x.shape[0]
    acc = jnp.zeros((rt, L_out), jnp.float32)
    for j in range(K):  # K is small & static: unrolled VPU adds on shifted views
        acc = acc + jax.lax.slice(x, (0, j), (rt, j + L_out))
    # count_include_pad=False divisor: number of in-bounds samples per window.
    i = jax.lax.broadcasted_iota(jnp.int32, (1, L_out), 1)
    lo = jnp.maximum(i - P, 0)
    hi = jnp.minimum(i - P + (K - 1), L - 1)
    count = (hi - lo + 1).astype(jnp.float32)
    o_ref[...] = (acc / count).astype(o_ref.dtype)


def average_forward(x: jax.Array, maxpoolwind: int) -> jax.Array:
    """Equivalent of Average(maxpoolwind).forward(x) for x of shape (..., L)."""
    K = maxpoolwind + 1
    P = maxpoolwind // 2
    lead = x.shape[:-1]
    L = x.shape[-1]
    L_out = L + 2 * P - K + 1
    assert L_out > 0, "pooling window larger than (padded) input length"

    rows = math.prod(lead) if lead else 1
    x2d = jnp.reshape(x, (rows, L))

    # Zero-pad lanes: P on the left for the pooling window, then up to a
    # multiple of 128 so the input DMA tile is lane-aligned and always legal.
    lpad_min = L + 2 * P
    Lpad = ((lpad_min + 127) // 128) * 128
    x2d = jnp.pad(x2d, ((0, 0), (P, Lpad - L - P)))

    # Tile rows by bytes (~4 MiB per input tile), rounded to the sublane pack.
    itemsize = jnp.dtype(x.dtype).itemsize
    sub = {4: 8, 2: 16, 1: 32}.get(itemsize, 8)
    target_bytes = 4 * 1024 * 1024
    row_tile = min(rows, max(sub, target_bytes // (Lpad * itemsize)))
    row_tile = max(sub, (row_tile // sub) * sub)
    rows_pad = ((rows + row_tile - 1) // row_tile) * row_tile
    if rows_pad != rows:
        x2d = jnp.pad(x2d, ((0, rows_pad - rows), (0, 0)))

    grid = (rows_pad // row_tile,)
    kernel = functools.partial(_avgpool1d_kernel, K=K, P=P, L=L, L_out=L_out)

    y2d = pl.pallas_call(
        kernel,
        out_shape=jax.ShapeDtypeStruct((rows_pad, L_out), x.dtype),
        grid_spec=pltpu.PrefetchScalarGridSpec(
            num_scalar_prefetch=0,
            grid=grid,
            in_specs=[pl.BlockSpec((row_tile, Lpad), lambda i: (i, 0))],
            out_specs=pl.BlockSpec((row_tile, L_out), lambda i: (i, 0)),
        ),
        compiler_params=pltpu.CompilerParams(
            dimension_semantics=("parallel",),   # shards rows across TCs on v7x
            vmem_limit_bytes=32 * 1024 * 1024,   # 2 bufs * (in+out tiles) << 32 MiB
        ),
    )(x2d)

    y2d = y2d[:rows]
    return jnp.reshape(y2d, (*lead, L_out))


def _reference_avgpool1d(x: jax.Array, maxpoolwind: int) -> jax.Array:
    """Pure-JAX reference of AvgPool1d(K, pad=P, stride=1, count_include_pad=False)."""
    K = maxpoolwind + 1
    P = maxpoolwind // 2
    L = x.shape[-1]
    L_out = L + 2 * P - K + 1
    xp = jnp.pad(x, [(0, 0)] * (x.ndim - 1) + [(P, P)])
    s = sum(xp[..., j:j + L_out] for j in range(K))
    i = jnp.arange(L_out)
    lo = jnp.maximum(i - P, 0)
    hi = jnp.minimum(i - P + (K - 1), L - 1)
    count = (hi - lo + 1).astype(x.dtype)
    return s / count


if __name__ == "__main__":
    key = jax.random.PRNGKey(0)
    k1, k2 = jax.random.split(key)

    # Case 1: lane-dense output (even maxpoolwind -> L_out == L == 256).
    mw1 = 4
    x1 = jax.random.normal(k1, (2, 4, 256), dtype=jnp.float32)
    y1 = jax.block_until_ready(average_forward(x1, mw1))
    ref1 = _reference_avgpool1d(x1, mw1)
    assert y1.shape == (2, 4, 256), y1.shape
    assert y1.dtype == x1.dtype
    assert bool(jnp.allclose(y1, ref1, rtol=1e-5, atol=1e-5))

    # Case 2: odd maxpoolwind (L_out = L - 1), non-multiple-of-128 lanes.
    mw2 = 3
    x2 = jax.random.normal(k2, (2, 4, 130), dtype=jnp.float32)
    y2 = jax.block_until_ready(average_forward(x2, mw2))
    ref2 = _reference_avgpool1d(x2, mw2)
    assert y2.shape == (2, 4, 129), y2.shape
    assert bool(jnp.allclose(y2, ref2, rtol=1e-5, atol=1e-5))

    print("KERNEL_OK")
</pallas_src>

<mosaic_0001>
module attributes {stable_mosaic.version = 11 : i64} {
  func.func @_avgpool1d_kernel(%arg0: i32, %arg1: memref<8x384xf32, #tpu.memory_space<vmem>>, %arg2: memref<8x256xf32, #tpu.memory_space<vmem>>) attributes {dimension_semantics = [#tpu.dimension_semantics<parallel>], iteration_bounds = array<i64: 1>, scalar_prefetch = 0 : i64, scratch_operands = 0 : i64, tpu.core_type = #tpu.core_type<tc>, window_params = [{transform_indices = @transform_0, window_bounds = array<i64: 8, 384>}, {transform_indices = @transform_1, window_bounds = array<i64: 8, 256>}]} {
    %c0 = arith.constant 0 : index
    %c0_0 = arith.constant 0 : index
    %0 = vector.load %arg1[%c0, %c0_0] : memref<8x384xf32, #tpu.memory_space<vmem>>, vector<8x384xf32>
    %cst = arith.constant 0.000000e+00 : f32
    %1 = vector.broadcast %cst : f32 to vector<8x256xf32>
    %2 = vector.extract_strided_slice %0 {offsets = [0, 0], sizes = [8, 256], strides = [1, 1]} : vector<8x384xf32> to vector<8x256xf32>
    %3 = arith.addf %1, %2 : vector<8x256xf32>
    %4 = vector.extract_strided_slice %0 {offsets = [0, 1], sizes = [8, 256], strides = [1, 1]} : vector<8x384xf32> to vector<8x256xf32>
    %5 = arith.addf %3, %4 : vector<8x256xf32>
    %6 = vector.extract_strided_slice %0 {offsets = [0, 2], sizes = [8, 256], strides = [1, 1]} : vector<8x384xf32> to vector<8x256xf32>
    %7 = arith.addf %5, %6 : vector<8x256xf32>
    %8 = vector.extract_strided_slice %0 {offsets = [0, 3], sizes = [8, 256], strides = [1, 1]} : vector<8x384xf32> to vector<8x256xf32>
    %9 = arith.addf %7, %8 : vector<8x256xf32>
    %10 = vector.extract_strided_slice %0 {offsets = [0, 4], sizes = [8, 256], strides = [1, 1]} : vector<8x384xf32> to vector<8x256xf32>
    %11 = arith.addf %9, %10 : vector<8x256xf32>
    %12 = tpu.iota {dimensions = array<i32: 1>} : vector<1x256xi32>
    %c2_i32 = arith.constant 2 : i32
    %13 = vector.broadcast %c2_i32 : i32 to vector<1x256xi32>
    %14 = arith.subi %12, %13 : vector<1x256xi32>
    %c0_i32 = arith.constant 0 : i32
    %15 = vector.broadcast %c0_i32 : i32 to vector<1x256xi32>
    %16 = arith.maxsi %14, %15 : vector<1x256xi32>
    %c2_i32_1 = arith.constant 2 : i32
    %17 = vector.broadcast %c2_i32_1 : i32 to vector<1x256xi32>
    %18 = arith.subi %12, %17 : vector<1x256xi32>
    %c4_i32 = arith.constant 4 : i32
    %19 = vector.broadcast %c4_i32 : i32 to vector<1x256xi32>
    %20 = arith.addi %18, %19 : vector<1x256xi32>
    %c255_i32 = arith.constant 255 : i32
    %21 = vector.broadcast %c255_i32 : i32 to vector<1x256xi32>
    %22 = arith.minsi %20, %21 : vector<1x256xi32>
    %23 = arith.subi %22, %16 : vector<1x256xi32>
    %c1_i32 = arith.constant 1 : i32
    %24 = vector.broadcast %c1_i32 : i32 to vector<1x256xi32>
    %25 = arith.addi %23, %24 : vector<1x256xi32>
    %26 = arith.sitofp %25 : vector<1x256xi32> to vector<1x256xf32>
    %27 = vector.broadcast %26 : vector<1x256xf32> to vector<8x256xf32>
    %28 = arith.divf %11, %27 : vector<8x256xf32>
    %c0_2 = arith.constant 0 : index
    %c0_3 = arith.constant 0 : index
    %29 = vector.load %arg2[%c0_2, %c0_3] : memref<8x256xf32, #tpu.memory_space<vmem>>, vector<8x256xf32>
    tpu.vector_store %arg2[%c0_2, %c0_3], %28 {strides = array<i32>} : memref<8x256xf32, #tpu.memory_space<vmem>>, vector<8x256xf32>,
    return
  }
  func.func @transform_0(%arg0: i32) -> (i32, i32) {
    %c0_i32 = arith.constant 0 : i32
    %c0_i32_0 = arith.constant 0 : i32
    return %arg0, %c0_i32 : i32, i32
  }
  func.func @transform_1(%arg0: i32) -> (i32, i32) {
    %c0_i32 = arith.constant 0 : i32
    %c0_i32_0 = arith.constant 0 : i32
    return %arg0, %c0_i32 : i32, i32
  }
}

</mosaic_0001>

<llo_original>
// kernel: tpu_custom_call.1
$region0: #{tpu_custom_call.1}
  #allocation0 [shape = 'u32[]', space=smem, size = 0x4, offset = 0x4, fixed_abs, tag = 'smem constant byte address 0x4 - core index']
  #allocation1 [shape = 'u32[144,128]{1,0:T(1,128)}', space=vmem, size = 0x12000, scoped, tag = 'internal scratch']
  %s0 = inlined_call_operand.hbm [shape: f32[8,384], index: 0, kind: input, shape index: {}]
  %s1 = inlined_call_operand.hbm [shape: f32[8,256], index: 1, kind: output, shape index: {}]
  %s2 = sld [smem:[#allocation0]]
  $region18: #{tpu_custom_call.1} parent=0
    _
  %s4 = ssub.s32 1, %s2
  %s5 = scalar_select 0, %s4, %s2
  $region1: #{tpu_custom_call.1} parent=0
    #allocation2 [shape = 'u8[12288]{0}', space=vmem, size = 0x3000, scoped, tag = 'input window, operand 0, single buffered']
    #allocation3 [shape = 's32[1]{0}', space=sflag, size = 0x4, scoped, tag = 'scoped memory for tpu_custom_call.1']
    #allocation4 [shape = 's32[1]{0}', space=sflag, size = 0x4, scoped, tag = 'scoped memory for tpu_custom_call.1']
    #allocation5 [shape = 'u8[8192]{0}', space=vmem, size = 0x2000, scoped, tag = 'output window, operand 0, single buffered']
    %6 = vsyncpa [#allocation3], 0
    %7 = vsyncpa [#allocation4], 0
    // Predicated region
    $region2: #{tpu_custom_call.1} parent=1 // pred_check
      _
    $region3: #{tpu_custom_call.1} parent=1 // pred_check_branch
      %9 = sbr.rel (0) target = $region5
    $region4: #{tpu_custom_call.1} parent=1 // pred_region
      %s11 = ssub.s32 384, 384
      %12 = vsyncadd [#allocation3], %s11
      %s14 = sshll.u32 [#allocation2], 4
      %s15 = int_to_ptr.vmem [resolvable:$true] %s14
      %17 = dma.hbm_to_vmem [thread:$0]  %s0, 384, %s15, [#allocation3]
    $region5: #{tpu_custom_call.1} parent=1 // pred_fallthru
      _
    // Predicated region
    $region6: #{tpu_custom_call.1} parent=1 // pred_check
      _
    $region7: #{tpu_custom_call.1} parent=1 // pred_check_branch
      %19 = sbr.rel (0) target = $region9
    $region8: #{tpu_custom_call.1} parent=1 // pred_region
      %20 = dma.done [#allocation3], 384
    $region9: #{tpu_custom_call.1} parent=1 // pred_fallthru
      _
    %v21 = vld [vmem:[#allocation2] sm:$0xff]
    %v22 = vld [vmem:[#allocation2 + $0x8] sm:$0xff]
    %v23 = vld [vmem:[#allocation2 + $0x10] sm:$0xff]
    %v24 = vadd.f32 %v21, 0.0
    %v25 = vadd.f32 %v22, 0.0
    %29 = vrot.lane.b32.xlu0 %v21, 127
    %v30 = vpop.permute.xlu0 %29
    %31 = vrot.lane.b32.xlu0 %v22, 127
    %v32 = vpop.permute.xlu0 %31
    %33 = vrot.lane.b32.xlu0 %v23, 127
    %v34 = vpop.permute.xlu0 %33
    %vm35 = vcmask 1039360
    %v36 = vsel %vm35, %v30, %v32
    %v37 = vsel %vm35, %v32, %v34
    %v40 = vadd.f32 %v24, %v36
    %v41 = vadd.f32 %v25, %v37
    %42 = vrot.lane.b32.xlu0 %v21, 126
    %v43 = vpop.permute.xlu0 %42
    %44 = vrot.lane.b32.xlu0 %v22, 126
    %v45 = vpop.permute.xlu0 %44
    %46 = vrot.lane.b32.xlu0 %v23, 126
    %v47 = vpop.permute.xlu0 %46
    %vm48 = vcmask 1031168
    %v49 = vsel %vm48, %v43, %v45
    %v50 = vsel %vm48, %v45, %v47
    %v53 = vadd.f32 %v40, %v49
    %v54 = vadd.f32 %v41, %v50
    %55 = vrot.lane.b32.xlu0 %v21, 125
    %v56 = vpop.permute.xlu0 %55
    %57 = vrot.lane.b32.xlu0 %v22, 125
    %v58 = vpop.permute.xlu0 %57
    %59 = vrot.lane.b32.xlu0 %v23, 125
    %v60 = vpop.permute.xlu0 %59
    %vm61 = vcmask 1022976
    %v62 = vsel %vm61, %v56, %v58
    %v63 = vsel %vm61, %v58, %v60
    %v66 = vadd.f32 %v53, %v62
    %v67 = vadd.f32 %v54, %v63
    %68 = vrot.lane.b32.xlu0 %v21, 124
    %v69 = vpop.permute.xlu0 %68
    %70 = vrot.lane.b32.xlu0 %v22, 124
    %v71 = vpop.permute.xlu0 %70
    %72 = vrot.lane.b32.xlu0 %v23, 124
    %v73 = vpop.permute.xlu0 %72
    %vm74 = vcmask 1014784
    %v75 = vsel %vm74, %v69, %v71
    %v76 = vsel %vm74, %v71, %v73
    %v79 = vadd.f32 %v66, %v75
    %v80 = vadd.f32 %v67, %v76
    %v81 = vlaneseq
    %v82 = vand.u32 %v81, 127
    %v83 = vadd.s32 %v82, 128
    %v84 = vsub.s32 %v82, 2
    %v85 = vsub.s32 %v83, 2
    %vm86 = vcmp.gt.s32.totalorder %v84, 0
    %v87 = vsel %vm86, %v84, 0
    %vm88 = vcmp.gt.s32.totalorder %v85, 0
    %v89 = vsel %vm88, %v85, 0
    %v90 = vadd.s32 %v84, 4
    %v91 = vadd.s32 %v85, 4
    %vm92 = vcmp.lt.s32.totalorder %v90, 255
    %v93 = vsel %vm92, %v90, 255
    %vm94 = vcmp.lt.s32.totalorder %v91, 255
    %v95 = vsel %vm94, %v91, 255
    %v96 = vsub.s32 %v93, %v87
    %v97 = vsub.s32 %v95, %v89
    %v98 = vadd.s32 %v96, 1
    %v99 = vadd.s32 %v97, 1
    %v100 = vcvt.s32.f32 %v98
    %v101 = vcvt.s32.f32 %v99
    %v102 = vrcp.pop %v100
    %v103 = vmul.f32 %v79, %v102
    %v104 = vrcp.pop %v101
    %v105 = vmul.f32 %v80, %v104
    %106 = vst [vmem:[#allocation5] sm:$0xff] %v103
    %107 = vst [vmem:[#allocation5 + $0x8] sm:$0xff] %v105
    // Predicated region
    $region10: #{tpu_custom_call.1} parent=1 // pred_check
      _
    $region11: #{tpu_custom_call.1} parent=1 // pred_check_branch
      %109 = sbr.rel (0) target = $region13
    $region12: #{tpu_custom_call.1} parent=1 // pred_region
      %s111 = ssub.s32 256, 256
      %112 = vsyncadd [#allocation4], %s111
      %s114 = sshll.u32 [#allocation5], 4
      %s115 = int_to_ptr.vmem [resolvable:$true] %s114
      %117 = dma.vmem_to_hbm [thread:$0]  %s115, 256, %s1, [#allocation4]
    $region13: #{tpu_custom_call.1} parent=1 // pred_fallthru
      _
    // Predicated region
    $region14: #{tpu_custom_call.1} parent=1 // pred_check
      _
    $region15: #{tpu_custom_call.1} parent=1 // pred_check_branch
      %119 = sbr.rel (0) target = $region17
    $region16: #{tpu_custom_call.1} parent=1 // pred_region
      %120 = dma.done [#allocation4], 256
    $region17: #{tpu_custom_call.1} parent=1 // pred_fallthru
      _
    %121 = vsyncpa [#allocation3], 1
    %122 = vsyncpa [#allocation4], 1

</llo_original>
